<compile_context>
chip_gen: v6e
topology: v6e:2x2x1
jax: 0.10.0
libtpu: 0.0.40
codegen_flags: <defaults>
</compile_context>

<pallas_src>
import functools

import jax
import jax.numpy as jnp
from jax.experimental import pallas as pl
from jax.experimental.pallas import tpu as pltpu

NOISE_DIM = 10
H1 = 64
H2 = 32
OUT = 1
BN_EPS = 1e-5
VMEM_LIMIT = 48 * 1024 * 1024


def _stats_kernel(noise_ref, w1_ref, b1_ref, sum_ref, sumsq_ref, *,
                  batch, tile):
    """Per-tile partial BN statistics of h1 = relu(W1 @ x + b1), transposed layout."""
    bt = pl.program_id(0)
    x = noise_ref[...].astype(jnp.bfloat16)                        # [10, tb]
    h1 = jnp.dot(w1_ref[...], x, preferred_element_type=jnp.float32)
    h1 = jnp.maximum(h1 + b1_ref[...], 0.0)                        # [64, tb]
    # Zero the padded batch columns so the statistics stay exact.
    valid = batch - bt * tile
    col = jax.lax.broadcasted_iota(jnp.int32, h1.shape, 1)
    h1 = jnp.where(col < valid, h1, 0.0)
    sum_ref[0] = jnp.sum(h1, axis=1, keepdims=True)                # [64, 1]
    sumsq_ref[0] = jnp.sum(h1 * h1, axis=1, keepdims=True)         # [64, 1]


def _forward_kernel(noise_ref, w1_ref, b1_ref, w2_ref, b2_ref, w3_ref, b3_ref,
                    out_ref):
    """Full forward in transposed (feature-major, batch-in-lanes) layout."""
    x = noise_ref[...].astype(jnp.bfloat16)                        # [10, tb]
    h1 = jnp.dot(w1_ref[...], x, preferred_element_type=jnp.float32)
    h1 = jnp.maximum(h1 + b1_ref[...], 0.0)                        # [64, tb]
    # BatchNorm is already folded into w2/b2 (done once in the wrapper).
    h2 = jnp.dot(w2_ref[...], h1.astype(jnp.bfloat16),
                 preferred_element_type=jnp.float32)
    h2 = jnp.maximum(h2 + b2_ref[...], 0.0)                        # [32, tb]
    h3 = jnp.dot(w3_ref[...], h2.astype(jnp.bfloat16),
                 preferred_element_type=jnp.float32) + b3_ref[...]  # [1, tb]
    # Lane-dense sigmoid + store (1 x tb row), no masked [tb,1] stores.
    out_ref[...] = jax.nn.sigmoid(h3).astype(out_ref.dtype)


def _pick_tile(batch, max_tile):
    """Batch tile: multiple of 128 (lane-dense output), capped at max_tile."""
    assert max_tile % 128 == 0, max_tile
    b_pad = ((batch + 127) // 128) * 128
    return min(b_pad, max_tile)


def standard_generator_forward(noise, params, *, max_tile=4096):
    """noise: [B, NOISE_DIM] float32 -> [B, 1] float32 (PyTorch training-mode BN)."""
    B = noise.shape[0]
    tb = _pick_tile(B, max_tile)
    nb = pl.cdiv(B, tb)
    b_pad = nb * tb

    # Batch-in-lanes layout: [NOISE_DIM, b_pad]; padded columns are zero.
    noise_t = jnp.pad(noise, ((0, b_pad - B), (0, 0))).T

    # Weights kept in PyTorch-native [out, in] layout; matmul operands bf16.
    w1 = params["w1"].astype(jnp.bfloat16)       # [64, 10]
    b1 = params["b1"]                            # [64, 1] f32
    w3 = params["w3"].astype(jnp.bfloat16)       # [1, 32]
    b3 = params["b3"]                            # [1, 1] f32

    const2 = lambda shape: pl.BlockSpec(shape, lambda b: (0, 0))
    cparams = pltpu.CompilerParams(dimension_semantics=("parallel",),
                                   vmem_limit_bytes=VMEM_LIMIT)

    # ---------- pass 1: per-tile partial BN statistics (parallel) ----------
    psum, psumsq = pl.pallas_call(
        functools.partial(_stats_kernel, batch=B, tile=tb),
        out_shape=(jax.ShapeDtypeStruct((nb, H1, 1), jnp.float32),
                   jax.ShapeDtypeStruct((nb, H1, 1), jnp.float32)),
        grid_spec=pltpu.PrefetchScalarGridSpec(
            num_scalar_prefetch=0,
            grid=(nb,),
            in_specs=[
                pl.BlockSpec((NOISE_DIM, tb), lambda b: (0, b)),   # noise.T tile
                const2((H1, NOISE_DIM)),                           # w1
                const2((H1, 1)),                                   # b1
            ],
            out_specs=[
                pl.BlockSpec((1, H1, 1), lambda b: (b, 0, 0)),     # partial sum
                pl.BlockSpec((1, H1, 1), lambda b: (b, 0, 0)),     # partial sumsq
            ]),
        compiler_params=cparams,
    )(noise_t, w1, b1)

    # ---------- BN fold (tiny [64]/[32,64] ops in plain JAX) ----------------
    # Biased batch variance, eps=1e-5 (PyTorch training-mode BatchNorm1d).
    mean = jnp.sum(psum, axis=0) / B                               # [64, 1]
    var = jnp.maximum(jnp.sum(psumsq, axis=0) / B - mean * mean, 0.0)
    inv_std = jax.lax.rsqrt(var + BN_EPS)
    scale = params["gamma"] * inv_std                              # [64, 1]
    shift = params["beta"] - mean * scale                          # [64, 1]
    w2f = (params["w2"] * scale.T).astype(jnp.bfloat16)            # [32, 64]
    b2f = params["b2"] + params["w2"] @ shift                      # [32, 1] f32

    # ---------- pass 2: forward, parallel tiles, lane-dense output ----------
    out_t = pl.pallas_call(
        _forward_kernel,
        out_shape=jax.ShapeDtypeStruct((1, b_pad), jnp.float32),
        grid_spec=pltpu.PrefetchScalarGridSpec(
            num_scalar_prefetch=0,
            grid=(nb,),
            in_specs=[
                pl.BlockSpec((NOISE_DIM, tb), lambda b: (0, b)),   # noise.T tile
                const2((H1, NOISE_DIM)),                           # w1
                const2((H1, 1)),                                   # b1
                const2((H2, H1)),                                  # folded w2'
                const2((H2, 1)),                                   # folded b2'
                const2((OUT, H2)),                                 # w3
                const2((OUT, 1)),                                  # b3
            ],
            out_specs=pl.BlockSpec((1, tb), lambda b: (0, b))),
        compiler_params=cparams,
    )(noise_t, w1, b1, w2f, b2f, w3, b3)

    # Drop padded columns, return PyTorch-shaped [B, 1].
    return out_t.reshape(b_pad)[:B].reshape(B, OUT)


def init_params(key):
    """Deterministic synthetic parameters in PyTorch-native [out, in] layout."""
    ks = jax.random.split(key, 6)

    def uniform(k, shape, fan_in):
        bound = 1.0 / jnp.sqrt(fan_in)
        return jax.random.uniform(k, shape, jnp.float32, -bound, bound)

    return {
        # Linear(noise_dim, 64)
        "w1": uniform(ks[0], (H1, NOISE_DIM), NOISE_DIM),
        "b1": uniform(ks[1], (H1, 1), NOISE_DIM),
        # BatchNorm1d(64) affine params (init: gamma=1, beta=0)
        "gamma": jnp.ones((H1, 1), jnp.float32),
        "beta": jnp.zeros((H1, 1), jnp.float32),
        # Linear(64, 32)
        "w2": uniform(ks[2], (H2, H1), H1),
        "b2": uniform(ks[3], (H2, 1), H1),
        # Linear(32, 1)
        "w3": uniform(ks[4], (OUT, H2), H2),
        "b3": uniform(ks[5], (OUT, 1), H2),
    }


def _reference_forward(noise, p):
    """Pure-JAX f32 reference (PyTorch training-mode BatchNorm semantics)."""
    h1 = jnp.maximum(noise @ p["w1"].T + p["b1"].T, 0.0)
    mean = jnp.mean(h1, axis=0, keepdims=True)
    var = jnp.mean((h1 - mean) ** 2, axis=0, keepdims=True)
    h1n = (h1 - mean) / jnp.sqrt(var + BN_EPS) * p["gamma"].T + p["beta"].T
    h2 = jnp.maximum(h1n @ p["w2"].T + p["b2"].T, 0.0)
    return jax.nn.sigmoid(h2 @ p["w3"].T + p["b3"].T)


if __name__ == "__main__":
    key = jax.random.PRNGKey(0)
    pkey, nkey = jax.random.split(key)

    params = init_params(pkey)
    batch = 8
    noise = jax.random.normal(nkey, (batch, NOISE_DIM), jnp.float32)

    out = jax.block_until_ready(standard_generator_forward(noise, params))
    ref = _reference_forward(noise, params)

    assert out.shape == (batch, OUT), out.shape
    # bf16 MXU operands + BN weight-fold -> relaxed tolerance vs f32 reference.
    max_err = float(jnp.max(jnp.abs(out - ref)))
    assert max_err < 3e-2, max_err

    print("KERNEL_OK")
</pallas_src>

<mosaic_0001>
module attributes {stable_mosaic.version = 11 : i64} {
  func.func @_stats_kernel(%arg0: i32, %arg1: memref<10x128xf32, #tpu.memory_space<vmem>>, %arg2: memref<64x10xbf16, #tpu.memory_space<vmem>>, %arg3: memref<64x1xf32, #tpu.memory_space<vmem>>, %arg4: memref<1x64x1xf32, #tpu.memory_space<vmem>>, %arg5: memref<1x64x1xf32, #tpu.memory_space<vmem>>) attributes {dimension_semantics = [#tpu.dimension_semantics<parallel>], iteration_bounds = array<i64: 1>, scalar_prefetch = 0 : i64, scratch_operands = 0 : i64, tpu.core_type = #tpu.core_type<tc>, window_params = [{transform_indices = @transform_0, window_bounds = array<i64: 10, 128>}, {pipeline_mode = #tpu.pipeline_mode<synchronous>, transform_indices = @transform_1, window_bounds = array<i64: 64, 10>}, {pipeline_mode = #tpu.pipeline_mode<synchronous>, transform_indices = @transform_2, window_bounds = array<i64: 64, 1>}, {transform_indices = @transform_3, window_bounds = array<i64: 1, 64, 1>}, {transform_indices = @transform_4, window_bounds = array<i64: 1, 64, 1>}]} {
    %c0 = arith.constant 0 : index
    %c0_0 = arith.constant 0 : index
    %0 = vector.load %arg1[%c0, %c0_0] : memref<10x128xf32, #tpu.memory_space<vmem>>, vector<10x128xf32>
    %1 = arith.truncf %0 : vector<10x128xf32> to vector<10x128xbf16>
    %c0_1 = arith.constant 0 : index
    %c0_2 = arith.constant 0 : index
    %2 = vector.load %arg2[%c0_1, %c0_2] : memref<64x10xbf16, #tpu.memory_space<vmem>>, vector<64x10xbf16>
    %cst = arith.constant dense<0.000000e+00> : vector<64x128xf32>
    %3 = tpu.matmul %2, %1, %cst {dimension_numbers = #tpu.dot_dimension_numbers<[1], [0], [0], [1], [0, 0, 1, 1], [], []>} : vector<64x10xbf16>, vector<10x128xbf16>, vector<64x128xf32> -> vector<64x128xf32>
    %c0_3 = arith.constant 0 : index
    %c0_4 = arith.constant 0 : index
    %4 = vector.load %arg3[%c0_3, %c0_4] : memref<64x1xf32, #tpu.memory_space<vmem>>, vector<64x1xf32>
    %5 = vector.broadcast %4 : vector<64x1xf32> to vector<64x128xf32>
    %6 = arith.addf %3, %5 : vector<64x128xf32>
    %cst_5 = arith.constant 0.000000e+00 : f32
    %7 = vector.broadcast %cst_5 : f32 to vector<64x128xf32>
    %8 = arith.maximumf %6, %7 : vector<64x128xf32>
    %c128_i32 = arith.constant 128 : i32
    %9 = arith.muli %arg0, %c128_i32 : i32
    %c8_i32 = arith.constant 8 : i32
    %10 = arith.subi %c8_i32, %9 : i32
    %11 = tpu.iota {dimensions = array<i32: 1>} : vector<64x128xi32>
    %12 = vector.broadcast %10 : i32 to vector<64x128xi32>
    %13 = arith.cmpi slt, %11, %12 : vector<64x128xi32>
    %cst_6 = arith.constant 0.000000e+00 : f32
    %14 = vector.broadcast %cst_6 : f32 to vector<64x128xf32>
    %15 = arith.select %13, %8, %14 : vector<64x128xi1>, vector<64x128xf32>
    %cst_7 = arith.constant dense<0.000000e+00> : vector<64xf32>
    %16 = vector.multi_reduction <add>, %15, %cst_7 [1] : vector<64x128xf32> to vector<64xf32>
    %17 = vector.shape_cast %16 : vector<64xf32> to vector<64x1xf32>
    %c0_8 = arith.constant 0 : index
    %c0_9 = arith.constant 0 : index
    %c0_10 = arith.constant 0 : index
    %18 = vector.load %arg4[%c0_8, %c0_9, %c0_10] : memref<1x64x1xf32, #tpu.memory_space<vmem>>, vector<1x64x1xf32>
    %19 = vector.shape_cast %18 : vector<1x64x1xf32> to vector<64x1xf32>
    %20 = vector.shape_cast %17 : vector<64x1xf32> to vector<1x64x1xf32>
    tpu.vector_store %arg4[%c0_8, %c0_9, %c0_10], %20 {strides = array<i32>} : memref<1x64x1xf32, #tpu.memory_space<vmem>>, vector<1x64x1xf32>,
    %21 = arith.mulf %15, %15 : vector<64x128xf32>
    %cst_11 = arith.constant dense<0.000000e+00> : vector<64xf32>
    %22 = vector.multi_reduction <add>, %21, %cst_11 [1] : vector<64x128xf32> to vector<64xf32>
    %23 = vector.shape_cast %22 : vector<64xf32> to vector<64x1xf32>
    %c0_12 = arith.constant 0 : index
    %c0_13 = arith.constant 0 : index
    %c0_14 = arith.constant 0 : index
    %24 = vector.load %arg5[%c0_12, %c0_13, %c0_14] : memref<1x64x1xf32, #tpu.memory_space<vmem>>, vector<1x64x1xf32>
    %25 = vector.shape_cast %24 : vector<1x64x1xf32> to vector<64x1xf32>
    %26 = vector.shape_cast %23 : vector<64x1xf32> to vector<1x64x1xf32>
    tpu.vector_store %arg5[%c0_12, %c0_13, %c0_14], %26 {strides = array<i32>} : memref<1x64x1xf32, #tpu.memory_space<vmem>>, vector<1x64x1xf32>,
    return
  }
  func.func @transform_0(%arg0: i32) -> (i32, i32) {
    %c0_i32 = arith.constant 0 : i32
    %c0_i32_0 = arith.constant 0 : i32
    return %c0_i32, %arg0 : i32, i32
  }
  func.func @transform_1(%arg0: i32) -> (i32, i32) {
    %c0_i32 = arith.constant 0 : i32
    %c0_i32_0 = arith.constant 0 : i32
    %c0_i32_1 = arith.constant 0 : i32
    return %c0_i32, %c0_i32_0 : i32, i32
  }
  func.func @transform_2(%arg0: i32) -> (i32, i32) {
    %c0_i32 = arith.constant 0 : i32
    %c0_i32_0 = arith.constant 0 : i32
    %c0_i32_1 = arith.constant 0 : i32
    return %c0_i32, %c0_i32_0 : i32, i32
  }
  func.func @transform_3(%arg0: i32) -> (i32, i32, i32) {
    %c0_i32 = arith.constant 0 : i32
    %c0_i32_0 = arith.constant 0 : i32
    %c0_i32_1 = arith.constant 0 : i32
    return %arg0, %c0_i32, %c0_i32_0 : i32, i32, i32
  }
  func.func @transform_4(%arg0: i32) -> (i32, i32, i32) {
    %c0_i32 = arith.constant 0 : i32
    %c0_i32_0 = arith.constant 0 : i32
    %c0_i32_1 = arith.constant 0 : i32
    return %arg0, %c0_i32, %c0_i32_0 : i32, i32, i32
  }
}

</mosaic_0001>

<llo_original>
// kernel: tpu_custom_call.1
$region0: #{tpu_custom_call.1}
  #allocation0 [shape = 'u32[]', space=smem, size = 0x4, offset = 0x4, fixed_abs, tag = 'smem constant byte address 0x4 - core index']
  #allocation1 [shape = 'u32[144,128]{1,0:T(1,128)}', space=vmem, size = 0x12000, scoped, tag = 'internal scratch']
  %s0 = inlined_call_operand.vmem [shape: f32[10,128], index: 0, kind: input, shape index: {}]
  %s1 = inlined_call_operand.vmem [shape: bf16[64,10], index: 1, kind: input, shape index: {}]
  %s2 = inlined_call_operand.vmem [shape: f32[64,1], index: 2, kind: input, shape index: {}]
  %s3 = inlined_call_operand.vmem [shape: f32[1,64,1], index: 3, kind: output, shape index: {0}]
  %s4 = inlined_call_operand.vmem [shape: f32[1,64,1], index: 4, kind: output, shape index: {1}]
  %5 = xla_tuple %s3, %s4
  %s6 = sld [smem:[#allocation0]]
  $region30: #{tpu_custom_call.1} parent=0
    _
  %s8 = ssub.s32 1, %s6
  %s9 = scalar_select 0, %s8, %s6
  // Predicated region
  $region2: #{tpu_custom_call.1} parent=0 // pred_check
    _
  $region3: #{tpu_custom_call.1} parent=0 // pred_check_branch
    %11 = sbr.rel (0) target = $region5
  $region4: #{tpu_custom_call.1} parent=0 // pred_region
    _
  $region5: #{tpu_custom_call.1} parent=0 // pred_fallthru
    _
  // Predicated region
  $region6: #{tpu_custom_call.1} parent=0 // pred_check
    _
  $region7: #{tpu_custom_call.1} parent=0 // pred_check_branch
    %13 = sbr.rel (0) target = $region9
  $region8: #{tpu_custom_call.1} parent=0 // pred_region
    _
  $region9: #{tpu_custom_call.1} parent=0 // pred_fallthru
    _
  // Predicated region
  $region10: #{tpu_custom_call.1} parent=0 // pred_check
    _
  $region11: #{tpu_custom_call.1} parent=0 // pred_check_branch
    %15 = sbr.rel (0) target = $region13
  $region12: #{tpu_custom_call.1} parent=0 // pred_region
    _
  $region13: #{tpu_custom_call.1} parent=0 // pred_fallthru
    _
  %v17 = vld [vmem:[%s0] sm:$0xff]
  %v18 = vld [vmem:[%s0 + $0x8] sm:$0x3]
  %v19 = vpack.c.bf16 %v18, %v17
  %v20 = vld [vmem:[%s1] sm:$0xf]
  %v21 = vld [vmem:[%s1 + $0x4] sm:$0xf]
  %v22 = vld [vmem:[%s1 + $0x8] sm:$0xf]
  %v23 = vld [vmem:[%s1 + $0xc] sm:$0xf]
  %v24 = vld [vmem:[%s1 + $0x10] sm:$0xf]
  %v25 = vld [vmem:[%s1 + $0x14] sm:$0xf]
  %v26 = vld [vmem:[%s1 + $0x18] sm:$0xf]
  %v27 = vld [vmem:[%s1 + $0x1c] sm:$0xf]
  %v28 = vld [vmem:[%s2] sm:$0xff]
  %v29 = vld [vmem:[%s2 + $0x8] sm:$0xff]
  %v30 = vld [vmem:[%s2 + $0x10] sm:$0xff]
  %v31 = vld [vmem:[%s2 + $0x18] sm:$0xff]
  %v32 = vld [vmem:[%s2 + $0x20] sm:$0xff]
  %v33 = vld [vmem:[%s2 + $0x28] sm:$0xff]
  %v34 = vld [vmem:[%s2 + $0x30] sm:$0xff]
  %v35 = vld [vmem:[%s2 + $0x38] sm:$0xff]
  %37 = vset.pattern.permute.xlu0 0
  %38 = vperm.xlu0 %37, %v28
  %v39 = vpop.permute.xlu0 %38
  %42 = vset.pattern.permute.xlu0 0
  %43 = vperm.xlu0 %42, %v29
  %v44 = vpop.permute.xlu0 %43
  %47 = vset.pattern.permute.xlu0 0
  %48 = vperm.xlu0 %47, %v30
  %v49 = vpop.permute.xlu0 %48
  %52 = vset.pattern.permute.xlu0 0
  %53 = vperm.xlu0 %52, %v31
  %v54 = vpop.permute.xlu0 %53
  %57 = vset.pattern.permute.xlu0 0
  %58 = vperm.xlu0 %57, %v32
  %v59 = vpop.permute.xlu0 %58
  %62 = vset.pattern.permute.xlu0 0
  %63 = vperm.xlu0 %62, %v33
  %v64 = vpop.permute.xlu0 %63
  %67 = vset.pattern.permute.xlu0 0
  %68 = vperm.xlu0 %67, %v34
  %v69 = vpop.permute.xlu0 %68
  %72 = vset.pattern.permute.xlu0 0
  %73 = vperm.xlu0 %72, %v35
  %v74 = vpop.permute.xlu0 %73
  %v84 = vunpack.c.l.b16 %v20
  %v85 = vunpack.c.l.b16 %v21
  %v86 = vunpack.c.l.b16 %v22
  %v87 = vunpack.c.l.b16 %v23
  %v88 = vunpack.c.l.b16 %v24
  %v89 = vunpack.c.l.b16 %v25
  %v90 = vunpack.c.l.b16 %v26
  %v91 = vunpack.c.l.b16 %v27
  %v92 = vpack.c.b16 %v85, %v84
  %v93 = vpack.c.b16 %v87, %v86
  %v94 = vpack.c.b16 %v89, %v88
  %v95 = vpack.c.b16 %v91, %v90
  %vm96 = vcmask 80896
  %v98 = vsel %vm96, %v92, 0
  %v101 = vsel %vm96, %v93, 0
  %v104 = vsel %vm96, %v94, 0
  %v107 = vsel %vm96, %v95, 0
  %vm109 = vcmask 1044480
  %v111 = vsel %vm109, %v19, 0
  %113 = vmatprep.subr.bf16.mxu0 0
  %114 = vmatpush1.bf16.msra.mxu0 0
  %115 = vmatprep.subr.bf16.mxu0 0
  %116 = vmatpush1.bf16.msra.mxu0 0
  %117 = vmatprep.subr.bf16.mxu0 0
  %118 = vmatpush1.bf16.msra.mxu0 0
  %119 = vmatprep.subr.bf16.mxu0 0
  %120 = vmatpush1.bf16.msra.mxu0 0
  %121 = vmatprep.subr.bf16.mxu0 0
  %122 = vmatpush1.bf16.msra.mxu0 0
  %123 = vmatprep.subr.bf16.mxu0 0
  %124 = vmatpush1.bf16.msra.mxu0 0
  %125 = vmatprep.subr.bf16.mxu0 0
  %126 = vmatpush1.bf16.msra.mxu0 0
  %127 = vmatprep.subr.bf16.mxu0 0
  %128 = vmatpush1.bf16.msra.mxu0 %v111
  %129 = vmatprep.subr.bf16.mxu0 0
  %130 = vmatpush2.bf16.msra.mxu0 0
  %131 = vmatprep.subr.bf16.mxu0 0
  %132 = vmatpush2.bf16.msra.mxu0 0
  %133 = vmatprep.subr.bf16.mxu0 0
  %134 = vmatpush2.bf16.msra.mxu0 0
  %135 = vmatprep.subr.bf16.mxu0 0
  %136 = vmatpush2.bf16.msra.mxu0 0
  %137 = vmatprep.subr.bf16.mxu0 0
  %138 = vmatpush2.bf16.msra.mxu0 0
  %139 = vmatprep.subr.bf16.mxu0 0
  %140 = vmatpush2.bf16.msra.mxu0 0
  %141 = vmatprep.subr.bf16.mxu0 0
  %142 = vmatpush2.bf16.msra.mxu0 0
  %143 = vmatprep.subr.bf16.mxu0 0
  %144 = vmatpush2.bf16.msra.mxu0 0
  %145 = vmatprep.mubr.bf16.mxu0 0
  %146 = vmatmul.mubr.bf16.gmra.mxu0 %v98
  %v147 = vpop.f32.mrf.mxu0
  %v148 = vadd.f32 %v39, %v147
  %v149 = vpop.f32.mrf.mxu0
  %v150 = vpop.f32.mrf.mxu0
  %v151 = vadd.f32 %v44, %v150
  %v152 = vpop.f32.mrf.mxu0
  %153 = vmatprep.mubr.bf16.mxu0 0
  %154 = vmatmul.mubr.bf16.gmra.mxu0 %v101
  %v155 = vpop.f32.mrf.mxu0
  %v156 = vadd.f32 %v49, %v155
  %v157 = vpop.f32.mrf.mxu0
  %v158 = vpop.f32.mrf.mxu0
  %v159 = vadd.f32 %v54, %v158
  %v160 = vpop.f32.mrf.mxu0
  %161 = vmatprep.mubr.bf16.mxu0 0
  %162 = vmatmul.mubr.bf16.gmra.mxu0 %v104
  %v163 = vpop.f32.mrf.mxu0
  %v164 = vadd.f32 %v59, %v163
  %v165 = vpop.f32.mrf.mxu0
  %v166 = vpop.f32.mrf.mxu0
  %v167 = vadd.f32 %v64, %v166
  %v168 = vpop.f32.mrf.mxu0
  %169 = vmatprep.mubr.bf16.mxu0 0
  %170 = vmatmul.mubr.bf16.gmra.mxu0 %v107
  %v171 = vpop.f32.mrf.mxu0
  %v172 = vadd.f32 %v69, %v171
  %v173 = vpop.f32.mrf.mxu0
  %v174 = vpop.f32.mrf.mxu0
  %v175 = vadd.f32 %v74, %v174
  %v176 = vpop.f32.mrf.mxu0
  %177 = vdwg.mxu0
  %v178 = vmax.f32 %v148, 0.0
  %v179 = vmax.f32 %v151, 0.0
  %v180 = vmax.f32 %v156, 0.0
  %v181 = vmax.f32 %v159, 0.0
  %v182 = vmax.f32 %v164, 0.0
  %v183 = vmax.f32 %v167, 0.0
  %v184 = vmax.f32 %v172, 0.0
  %v185 = vmax.f32 %v175, 0.0
  %s186 = smul.u32 0, 128
  %s187 = ssub.s32 8, %s186
  %v188 = vlaneseq
  %v189 = vand.u32 %v188, 127
  %v190 = vstv %s187
  %vm191 = vcmp.lt.s32.totalorder %v189, %v190
  %v192 = vsel %vm191, %v178, 0.0
  %v193 = vsel %vm191, %v179, 0.0
  %v194 = vsel %vm191, %v180, 0.0
  %v195 = vsel %vm191, %v181, 0.0
  %v196 = vsel %vm191, %v182, 0.0
  %v197 = vsel %vm191, %v183, 0.0
  %v198 = vsel %vm191, %v184, 0.0
  %v199 = vsel %vm191, %v185, 0.0
  %200 = vadd.xlane.f32.xlu0 %v192
  %v201 = vpop.xlane.xlu0 %200
  %202 = vadd.xlane.f32.xlu0 %v193
  %v203 = vpop.xlane.xlu0 %202
  %204 = vadd.xlane.f32.xlu0 %v194
  %v205 = vpop.xlane.xlu0 %204
  %206 = vadd.xlane.f32.xlu0 %v195
  %v207 = vpop.xlane.xlu0 %206
  %208 = vadd.xlane.f32.xlu0 %v196
  %v209 = vpop.xlane.xlu0 %208
  %210 = vadd.xlane.f32.xlu0 %v197
  %v211 = vpop.xlane.xlu0 %210
  %212 = vadd.xlane.f32.xlu0 %v198
  %v213 = vpop.xlane.xlu0 %212
  %214 = vadd.xlane.f32.xlu0 %v199
  %v215 = vpop.xlane.xlu0 %214
  %vm216 = vcmask 7168
  %217 = vst.msk [vmem:[%s3] sm:$0xff] %vm216, %v201
  %218 = vst.msk [vmem:[%s3 + $0x8] sm:$0xff] %vm216, %v203
  %219 = vst.msk [vmem:[%s3 + $0x10] sm:$0xff] %vm216, %v205
  %220 = vst.msk [vmem:[%s3 + $0x18] sm:$0xff] %vm216, %v207
  %221 = vst.msk [vmem:[%s3 + $0x20] sm:$0xff] %vm216, %v209
  %222 = vst.msk [vmem:[%s3 + $0x28] sm:$0xff] %vm216, %v211
  %223 = vst.msk [vmem:[%s3 + $0x30] sm:$0xff] %vm216, %v213
  %224 = vst.msk [vmem:[%s3 + $0x38] sm:$0xff] %vm216, %v215
  %v225 = vmul.f32 %v192, %v192
  %v226 = vmul.f32 %v193, %v193
  %v227 = vmul.f32 %v194, %v194
  %v228 = vmul.f32 %v195, %v195
  %v229 = vmul.f32 %v196, %v196
  %v230 = vmul.f32 %v197, %v197
  %v231 = vmul.f32 %v198, %v198
  %v232 = vmul.f32 %v199, %v199
  %233 = vadd.xlane.f32.xlu0 %v225
  %v234 = vpop.xlane.xlu0 %233
  %235 = vadd.xlane.f32.xlu0 %v226
  %v236 = vpop.xlane.xlu0 %235
  %237 = vadd.xlane.f32.xlu0 %v227
  %v238 = vpop.xlane.xlu0 %237
  %239 = vadd.xlane.f32.xlu0 %v228
  %v240 = vpop.xlane.xlu0 %239
  %241 = vadd.xlane.f32.xlu0 %v229
  %v242 = vpop.xlane.xlu0 %241
  %243 = vadd.xlane.f32.xlu0 %v230
  %v244 = vpop.xlane.xlu0 %243
  %245 = vadd.xlane.f32.xlu0 %v231
  %v246 = vpop.xlane.xlu0 %245
  %247 = vadd.xlane.f32.xlu0 %v232
  %v248 = vpop.xlane.xlu0 %247
  %249 = vst.msk [vmem:[%s4] sm:$0xff] %vm216, %v234
  %250 = vst.msk [vmem:[%s4 + $0x8] sm:$0xff] %vm216, %v236
  %251 = vst.msk [vmem:[%s4 + $0x10] sm:$0xff] %vm216, %v238
  %252 = vst.msk [vmem:[%s4 + $0x18] sm:$0xff] %vm216, %v240
  %253 = vst.msk [vmem:[%s4 + $0x20] sm:$0xff] %vm216, %v242
  %254 = vst.msk [vmem:[%s4 + $0x28] sm:$0xff] %vm216, %v244
  %255 = vst.msk [vmem:[%s4 + $0x30] sm:$0xff] %vm216, %v246
  %256 = vst.msk [vmem:[%s4 + $0x38] sm:$0xff] %vm216, %v248
  // Predicated region
  $region14: #{tpu_custom_call.1} parent=0 // pred_check
    _
  $region15: #{tpu_custom_call.1} parent=0 // pred_check_branch
    %258 = sbr.rel (0) target = $region17
  $region16: #{tpu_custom_call.1} parent=0 // pred_region
    _
  $region17: #{tpu_custom_call.1} parent=0 // pred_fallthru
    _
  // Predicated region
  $region18: #{tpu_custom_call.1} parent=0 // pred_check
    _
  $region19: #{tpu_custom_call.1} parent=0 // pred_check_branch
    %260 = sbr.rel (0) target = $region21
  $region20: #{tpu_custom_call.1} parent=0 // pred_region
    _
  $region21: #{tpu_custom_call.1} parent=0 // pred_fallthru
    _
  // Predicated region
  $region22: #{tpu_custom_call.1} parent=0 // pred_check
    _
  $region23: #{tpu_custom_call.1} parent=0 // pred_check_branch
    %262 = sbr.rel (0) target = $region25
  $region24: #{tpu_custom_call.1} parent=0 // pred_region
    _
  $region25: #{tpu_custom_call.1} parent=0 // pred_fallthru
    _
  // Predicated region
  $region26: #{tpu_custom_call.1} parent=0 // pred_check
    _
  $region27: #{tpu_custom_call.1} parent=0 // pred_check_branch
    %264 = sbr.rel (0) target = $region29
  $region28: #{tpu_custom_call.1} parent=0 // pred_region
    _
  $region29: #{tpu_custom_call.1} parent=0 // pred_fallthru
    _

</llo_original>
